<compile_context>
chip_gen: v5e
topology: v5e:2x2
jax: 0.10.0
libtpu: 0.0.40
codegen_flags: <defaults>
</compile_context>

<pallas_src>
import functools

import jax
import jax.numpy as jnp
import numpy as np
from jax.experimental import pallas as pl
from jax.experimental.pallas import tpu as pltpu


# ----------------------------- kernels -------------------------------------


def _sage_mean_pooling_kernel_kron(self_ref, neigh_ref, w_blk_ref, b_ref,
                                   w_self_ref, w_stack_ref, out_ref):
    """Small-K path: per-neighbor MLP done as ONE matmul against a block-diagonal weight."""
    cd = w_blk_ref.dtype  # MXU dtype; streamed f32 tiles are cast here (hidden under DMA/MXU)
    # (tn, K*Cin) @ (K*Cin, K*H) block-diagonal weight -> (tn, K*H)
    h = jnp.dot(neigh_ref[...].astype(cd), w_blk_ref[...],
                preferred_element_type=jnp.float32)
    h = jnp.maximum(h + b_ref[...], 0.0)              # bias + ReLU stay f32 (v5e-safe)

    # mean over K neighbors + neighbor projection folded into vstack([W_neigh/K]*K):
    # (tn, K*H) @ (K*H, Cout_pad) -> (tn, Cout_pad)
    from_neigh = jnp.dot(h.astype(cd), w_stack_ref[...],
                         preferred_element_type=jnp.float32)
    # self projection: (tn, Cin) @ (Cin, Cout_pad)
    from_self = jnp.dot(self_ref[...].astype(cd), w_self_ref[...],
                        preferred_element_type=jnp.float32)

    out_ref[...] = jnp.maximum(from_self + from_neigh, 0.0).astype(out_ref.dtype)


def _sage_mean_pooling_kernel_grouped(self_ref, neigh_ref, w_mlp_ref, b_ref,
                                      w_self_ref, w_neigh_ref, out_ref, *, k):
    """Large-K path: neigh_ref is (K, tn, Cin); per-neighbor MLP with the plain (Cin,H)
    weight, mean accumulated in f32 (avoids the K^2 block-diagonal weight)."""
    cd = w_mlp_ref.dtype
    w_mlp = w_mlp_ref[...]
    b = b_ref[...]
    acc = jnp.zeros((self_ref.shape[0], w_mlp.shape[1]), jnp.float32)
    for kk in range(k):  # K is static -> fully unrolled
        h_k = jnp.dot(neigh_ref[kk].astype(cd), w_mlp,
                      preferred_element_type=jnp.float32)
        acc = acc + jnp.maximum(h_k + b, 0.0)
    neigh_mean = acc * (1.0 / k)

    from_neigh = jnp.dot(neigh_mean.astype(cd), w_neigh_ref[...],
                         preferred_element_type=jnp.float32)
    from_self = jnp.dot(self_ref[...].astype(cd), w_self_ref[...],
                        preferred_element_type=jnp.float32)
    out_ref[...] = jnp.maximum(from_self + from_neigh, 0.0).astype(out_ref.dtype)


# ----------------------------- helpers -------------------------------------


def _vmem_capacity_bytes():
    try:
        return int(pltpu.get_tpu_info().vmem_capacity_bytes)
    except Exception:
        return 64 << 20  # conservative fallback (v7x per-TensorCore VMEM)


def _resident_spec(shape):
    """Grid-invariant operand: constant index_map + single buffering when supported."""
    index_map = lambda i: (0,) * len(shape)
    try:
        return pl.BlockSpec(shape, index_map, pipeline_mode=pl.Buffered(1))
    except (TypeError, AttributeError):
        return pl.BlockSpec(shape, index_map)


def _pick_tile_n(n, per_row_bytes, budget_bytes):
    t = max(budget_bytes // max(per_row_bytes, 1), 8)
    # Ensure >=2 grid steps when N allows: DMA/compute overlap + megacore sharding (v7x).
    if n >= 16:
        t = min(t, n // 2)
    t = min(t, n)
    t = max((t // 8) * 8, min(n, 8))
    # Hardware-friendly multiples: 256-row MXU passes (v6e/v7x), 16-row bf16 sublane packs.
    if t >= 256:
        t = (t // 256) * 256
    elif t >= 16:
        t = (t // 16) * 16
    # Prefer a divisor of N: avoids a separate wrapper-side jnp.pad pass over the inputs.
    cand = t
    while cand >= 8:
        if n % cand == 0:
            return cand
        cand -= 8
    return t


# ----------------------------- wrapper --------------------------------------


def sage_conv_mean_pooling(self_vecs, neigh_vecs, mlp_w, mlp_b,
                           self_weight, neigh_weight, *,
                           tile_n=None, compute_dtype=jnp.bfloat16):
    N, K, Cin = neigh_vecs.shape
    H = mlp_w.shape[1]
    Cout = self_weight.shape[1]
    out_dtype = self_vecs.dtype
    cd = compute_dtype

    cout_pad = pl.cdiv(Cout, 128) * 128          # lane-dense, unmasked output stores
    pad_c = cout_pad - Cout

    in_bytes = jnp.dtype(self_vecs.dtype).itemsize   # streamed inputs keep their dtype (f32)
    store_bytes = jnp.dtype(cd).itemsize              # kernel writes compute_dtype (bf16 default)

    vmem_cap = _vmem_capacity_bytes()
    budget = min(24 << 20, vmem_cap // 4)              # ~24 MiB on 128 MiB parts, ~16 MiB on v7x

    per_row = 2 * ((K + 1) * Cin * in_bytes + cout_pad * store_bytes)
    if tile_n is None:
        tile_n = _pick_tile_n(N, per_row, budget)
    n_pad = pl.cdiv(N, tile_n) * tile_n

    # Gate the K^2 block-diagonal trick to small fan-outs (it exactly fills a 128-deep
    # contraction at K=4/Cin=32); larger K uses the grouped kernel.
    use_kron = (K <= 8) and (K * Cin <= 256)

    w_self_c = jnp.pad(self_weight, ((0, 0), (0, pad_c))).astype(cd)

    if use_kron:
        neigh_in = neigh_vecs.reshape(N, K * Cin)                # free row-major view, stays f32
        w_mlp_c = jnp.kron(jnp.eye(K, dtype=mlp_w.dtype), mlp_w).astype(cd)   # (K*Cin, K*H)
        b_in = jnp.tile(mlp_b.reshape(1, H), (1, K)).astype(jnp.float32)       # (1, K*H)
        w_neigh_c = jnp.pad(jnp.tile(neigh_weight, (K, 1)) * (1.0 / K),
                            ((0, 0), (0, pad_c))).astype(cd)     # (K*H, Cout_pad), mean folded in
        if n_pad != N:
            neigh_in = jnp.pad(neigh_in, ((0, n_pad - N), (0, 0)))
        neigh_spec = pl.BlockSpec((tile_n, K * Cin), lambda i: (i, 0))
        w_mlp_spec = _resident_spec((K * Cin, K * H))
        b_spec = _resident_spec((1, K * H))
        w_neigh_spec = _resident_spec((K * H, cout_pad))
        kernel = _sage_mean_pooling_kernel_kron
        mm_flops = K * Cin * K * H + K * H * cout_pad + Cin * cout_pad
        weight_elems = K * Cin * K * H + Cin * cout_pad + K * H * cout_pad
        bias_elems = K * H
    else:
        # TODO(synk): for very large K one could additionally tile the K axis of the grid.
        neigh_in = jnp.transpose(neigh_vecs, (1, 0, 2))          # (K, N, Cin), stays f32
        w_mlp_c = mlp_w.astype(cd)                               # (Cin, H)
        b_in = mlp_b.reshape(1, H).astype(jnp.float32)
        w_neigh_c = jnp.pad(neigh_weight, ((0, 0), (0, pad_c))).astype(cd)   # (H, Cout_pad)
        if n_pad != N:
            neigh_in = jnp.pad(neigh_in, ((0, 0), (0, n_pad - N), (0, 0)))
        neigh_spec = pl.BlockSpec((K, tile_n, Cin), lambda i: (0, i, 0))
        w_mlp_spec = _resident_spec((Cin, H))
        b_spec = _resident_spec((1, H))
        w_neigh_spec = _resident_spec((H, cout_pad))
        kernel = functools.partial(_sage_mean_pooling_kernel_grouped, k=K)
        mm_flops = K * Cin * H + H * cout_pad + Cin * cout_pad
        weight_elems = Cin * H + Cin * cout_pad + H * cout_pad
        bias_elems = H

    self_in = self_vecs
    if n_pad != N:
        self_in = jnp.pad(self_in, ((0, n_pad - N), (0, 0)))

    grid = (n_pad // tile_n,)

    cost = pl.CostEstimate(
        flops=int(2 * n_pad * mm_flops),
        transcendentals=0,
        bytes_accessed=int(n_pad * (K + 1) * Cin * in_bytes
                           + n_pad * cout_pad * store_bytes
                           + weight_elems * store_bytes + bias_elems * 4),
    )

    cd_bytes = jnp.dtype(cd).itemsize
    vmem_need = (2 * tile_n * ((K + 1) * Cin * in_bytes + cout_pad * store_bytes)
                 + weight_elems * cd_bytes + bias_elems * 4)
    compiler_kwargs = dict(dimension_semantics=("parallel",))
    if vmem_need > (16 << 20):
        # Generation-aware cap: ~80% of physical VMEM (64 MiB/TC on v7x, 128 MiB on v5e/v6e).
        compiler_kwargs["vmem_limit_bytes"] = int(
            min(vmem_need + (8 << 20), (vmem_cap * 4) // 5))

    out_padded = pl.pallas_call(
        kernel,
        out_shape=jax.ShapeDtypeStruct((n_pad, cout_pad), cd),   # narrow (bf16) writeback
        grid_spec=pltpu.PrefetchScalarGridSpec(
            num_scalar_prefetch=0,
            grid=grid,
            in_specs=[
                pl.BlockSpec((tile_n, Cin), lambda i: (i, 0)),   # self tile (f32, cast in kernel)
                neigh_spec,                                      # neighbor tile (f32, cast in kernel)
                w_mlp_spec,                                      # MLP weight (resident)
                b_spec,                                          # MLP bias (resident, f32)
                _resident_spec((Cin, cout_pad)),                 # self projection weight (resident)
                w_neigh_spec,                                    # neighbor projection weight (resident)
            ],
            out_specs=pl.BlockSpec((tile_n, cout_pad), lambda i: (i, 0)),
        ),
        compiler_params=pltpu.CompilerParams(**compiler_kwargs),
        cost_estimate=cost,
    )(self_in, neigh_in, w_mlp_c, b_in, w_self_c, w_neigh_c)

    return out_padded[:N, :Cout].astype(out_dtype)


# ----------------------------- init helpers / demo --------------------------


def _xavier_normal(key, fan_in, fan_out, dtype=jnp.float32):
    std = float(np.sqrt(2.0 / (fan_in + fan_out)))
    return jax.random.normal(key, (fan_in, fan_out), dtype) * std


def _kaiming_uniform_linear(key, fan_in, fan_out, dtype=jnp.float32):
    # torch.nn.Linear default init -> U(-1/sqrt(fan_in), 1/sqrt(fan_in))
    bound = 1.0 / float(np.sqrt(fan_in))
    return jax.random.uniform(key, (fan_in, fan_out), dtype, -bound, bound)


def _reference(self_vecs, neigh_vecs, mlp_w, mlp_b, self_weight, neigh_weight):
    h = jnp.maximum(jnp.einsum("nkc,ch->nkh", neigh_vecs, mlp_w) + mlp_b, 0.0)
    neigh_mean = jnp.mean(h, axis=1)
    return jnp.maximum(self_vecs @ self_weight + neigh_mean @ neigh_weight, 0.0)


if __name__ == "__main__":
    key = jax.random.PRNGKey(0)

    # --- Test 1: SAGEConv(32, 16), default mean_pooling, K=4 (small-K kron path) ---
    N, K, Cin, Cout = 16, 4, 32, 16
    H = Cin
    k1, k2, k3, k4, k5, k6, key = jax.random.split(key, 7)
    self_vecs = jax.random.normal(k1, (N, Cin), jnp.float32)
    neigh_vecs = jax.random.normal(k2, (N, K, Cin), jnp.float32)
    mlp_w = _kaiming_uniform_linear(k3, Cin, H)
    bound = 1.0 / float(np.sqrt(Cin))
    mlp_b = jax.random.uniform(k4, (H,), jnp.float32, -bound, bound)
    self_weight = _xavier_normal(k5, Cin, Cout)
    neigh_weight = _xavier_normal(k6, H, Cout)

    ref = _reference(self_vecs, neigh_vecs, mlp_w, mlp_b, self_weight, neigh_weight)

    out_f32 = sage_conv_mean_pooling(self_vecs, neigh_vecs, mlp_w, mlp_b,
                                     self_weight, neigh_weight,
                                     compute_dtype=jnp.float32)
    out_f32 = jax.block_until_ready(out_f32)
    np.testing.assert_allclose(np.asarray(out_f32), np.asarray(ref), rtol=1e-3, atol=1e-3)

    out_bf16 = sage_conv_mean_pooling(self_vecs, neigh_vecs, mlp_w, mlp_b,
                                      self_weight, neigh_weight)
    out_bf16 = jax.block_until_ready(out_bf16)
    np.testing.assert_allclose(np.asarray(out_bf16), np.asarray(ref), rtol=5e-2, atol=1e-1)

    # --- Test 2: larger fan-out K=12 exercises the grouped (non-kron) kernel path ---
    N2, K2, Cin2, Cout2 = 32, 12, 32, 16
    H2 = Cin2
    j1, j2, j3, j4, j5, j6, key = jax.random.split(key, 7)
    self2 = jax.random.normal(j1, (N2, Cin2), jnp.float32)
    neigh2 = jax.random.normal(j2, (N2, K2, Cin2), jnp.float32)
    mlp_w2 = _kaiming_uniform_linear(j3, Cin2, H2)
    bound2 = 1.0 / float(np.sqrt(Cin2))
    mlp_b2 = jax.random.uniform(j4, (H2,), jnp.float32, -bound2, bound2)
    sw2 = _xavier_normal(j5, Cin2, Cout2)
    nw2 = _xavier_normal(j6, H2, Cout2)

    ref2 = _reference(self2, neigh2, mlp_w2, mlp_b2, sw2, nw2)

    out2_f32 = sage_conv_mean_pooling(self2, neigh2, mlp_w2, mlp_b2, sw2, nw2,
                                      compute_dtype=jnp.float32)
    out2_f32 = jax.block_until_ready(out2_f32)
    np.testing.assert_allclose(np.asarray(out2_f32), np.asarray(ref2), rtol=1e-3, atol=1e-3)

    out2_bf16 = sage_conv_mean_pooling(self2, neigh2, mlp_w2, mlp_b2, sw2, nw2)
    out2_bf16 = jax.block_until_ready(out2_bf16)
    np.testing.assert_allclose(np.asarray(out2_bf16), np.asarray(ref2), rtol=5e-2, atol=1e-1)

    print("KERNEL_OK")
</pallas_src>

<mosaic_0001>
module attributes {stable_mosaic.version = 11 : i64} {
  func.func @_sage_mean_pooling_kernel_kron(%arg0: i32, %arg1: memref<8x32xf32, #tpu.memory_space<vmem>>, %arg2: memref<8x128xf32, #tpu.memory_space<vmem>>, %arg3: memref<128x128xf32, #tpu.memory_space<vmem>>, %arg4: memref<1x128xf32, #tpu.memory_space<vmem>>, %arg5: memref<32x128xf32, #tpu.memory_space<vmem>>, %arg6: memref<128x128xf32, #tpu.memory_space<vmem>>, %arg7: memref<8x128xf32, #tpu.memory_space<vmem>>) attributes {dimension_semantics = [#tpu.dimension_semantics<parallel>], iteration_bounds = array<i64: 2>, scalar_prefetch = 0 : i64, scratch_operands = 0 : i64, tpu.core_type = #tpu.core_type<tc>, window_params = [{transform_indices = @transform_0, window_bounds = array<i64: 8, 32>}, {transform_indices = @transform_1, window_bounds = array<i64: 8, 128>}, {pipeline_mode = #tpu.pipeline_mode<synchronous>, transform_indices = @transform_2, window_bounds = array<i64: 128, 128>}, {pipeline_mode = #tpu.pipeline_mode<synchronous>, transform_indices = @transform_3, window_bounds = array<i64: 1, 128>}, {pipeline_mode = #tpu.pipeline_mode<synchronous>, transform_indices = @transform_4, window_bounds = array<i64: 32, 128>}, {pipeline_mode = #tpu.pipeline_mode<synchronous>, transform_indices = @transform_5, window_bounds = array<i64: 128, 128>}, {transform_indices = @transform_6, window_bounds = array<i64: 8, 128>}]} {
    %c0 = arith.constant 0 : index
    %c0_0 = arith.constant 0 : index
    %0 = vector.load %arg2[%c0, %c0_0] : memref<8x128xf32, #tpu.memory_space<vmem>>, vector<8x128xf32>
    %c0_1 = arith.constant 0 : index
    %c0_2 = arith.constant 0 : index
    %1 = vector.load %arg3[%c0_1, %c0_2] : memref<128x128xf32, #tpu.memory_space<vmem>>, vector<128x128xf32>
    %cst = arith.constant dense<0.000000e+00> : vector<8x128xf32>
    %2 = tpu.matmul %0, %1, %cst {dimension_numbers = #tpu.dot_dimension_numbers<[1], [0], [0], [1], [0, 0, 1, 1], [], []>} : vector<8x128xf32>, vector<128x128xf32>, vector<8x128xf32> -> vector<8x128xf32>
    %c0_3 = arith.constant 0 : index
    %c0_4 = arith.constant 0 : index
    %3 = vector.load %arg4[%c0_3, %c0_4] : memref<1x128xf32, #tpu.memory_space<vmem>>, vector<1x128xf32>
    %4 = vector.broadcast %3 : vector<1x128xf32> to vector<8x128xf32>
    %5 = arith.addf %2, %4 : vector<8x128xf32>
    %cst_5 = arith.constant 0.000000e+00 : f32
    %6 = vector.broadcast %cst_5 : f32 to vector<8x128xf32>
    %7 = arith.maximumf %5, %6 : vector<8x128xf32>
    %c0_6 = arith.constant 0 : index
    %c0_7 = arith.constant 0 : index
    %8 = vector.load %arg6[%c0_6, %c0_7] : memref<128x128xf32, #tpu.memory_space<vmem>>, vector<128x128xf32>
    %cst_8 = arith.constant dense<0.000000e+00> : vector<8x128xf32>
    %9 = tpu.matmul %7, %8, %cst_8 {dimension_numbers = #tpu.dot_dimension_numbers<[1], [0], [0], [1], [0, 0, 1, 1], [], []>} : vector<8x128xf32>, vector<128x128xf32>, vector<8x128xf32> -> vector<8x128xf32>
    %c0_9 = arith.constant 0 : index
    %c0_10 = arith.constant 0 : index
    %10 = vector.load %arg1[%c0_9, %c0_10] : memref<8x32xf32, #tpu.memory_space<vmem>>, vector<8x32xf32>
    %c0_11 = arith.constant 0 : index
    %c0_12 = arith.constant 0 : index
    %11 = vector.load %arg5[%c0_11, %c0_12] : memref<32x128xf32, #tpu.memory_space<vmem>>, vector<32x128xf32>
    %cst_13 = arith.constant dense<0.000000e+00> : vector<8x128xf32>
    %12 = tpu.matmul %10, %11, %cst_13 {dimension_numbers = #tpu.dot_dimension_numbers<[1], [0], [0], [1], [0, 0, 1, 1], [], []>} : vector<8x32xf32>, vector<32x128xf32>, vector<8x128xf32> -> vector<8x128xf32>
    %13 = arith.addf %12, %9 : vector<8x128xf32>
    %cst_14 = arith.constant 0.000000e+00 : f32
    %14 = vector.broadcast %cst_14 : f32 to vector<8x128xf32>
    %15 = arith.maximumf %13, %14 : vector<8x128xf32>
    %c0_15 = arith.constant 0 : index
    %c0_16 = arith.constant 0 : index
    %16 = vector.load %arg7[%c0_15, %c0_16] : memref<8x128xf32, #tpu.memory_space<vmem>>, vector<8x128xf32>
    tpu.vector_store %arg7[%c0_15, %c0_16], %15 {strides = array<i32>} : memref<8x128xf32, #tpu.memory_space<vmem>>, vector<8x128xf32>,
    return
  }
  func.func @transform_0(%arg0: i32) -> (i32, i32) {
    %c0_i32 = arith.constant 0 : i32
    %c0_i32_0 = arith.constant 0 : i32
    return %arg0, %c0_i32 : i32, i32
  }
  func.func @transform_1(%arg0: i32) -> (i32, i32) {
    %c0_i32 = arith.constant 0 : i32
    %c0_i32_0 = arith.constant 0 : i32
    return %arg0, %c0_i32 : i32, i32
  }
  func.func @transform_2(%arg0: i32) -> (i32, i32) {
    %c0_i32 = arith.constant 0 : i32
    %c0_i32_0 = arith.constant 0 : i32
    %c0_i32_1 = arith.constant 0 : i32
    return %c0_i32, %c0_i32_0 : i32, i32
  }
  func.func @transform_3(%arg0: i32) -> (i32, i32) {
    %c0_i32 = arith.constant 0 : i32
    %c0_i32_0 = arith.constant 0 : i32
    %c0_i32_1 = arith.constant 0 : i32
    return %c0_i32, %c0_i32_0 : i32, i32
  }
  func.func @transform_4(%arg0: i32) -> (i32, i32) {
    %c0_i32 = arith.constant 0 : i32
    %c0_i32_0 = arith.constant 0 : i32
    %c0_i32_1 = arith.constant 0 : i32
    return %c0_i32, %c0_i32_0 : i32, i32
  }
  func.func @transform_5(%arg0: i32) -> (i32, i32) {
    %c0_i32 = arith.constant 0 : i32
    %c0_i32_0 = arith.constant 0 : i32
    %c0_i32_1 = arith.constant 0 : i32
    return %c0_i32, %c0_i32_0 : i32, i32
  }
  func.func @transform_6(%arg0: i32) -> (i32, i32) {
    %c0_i32 = arith.constant 0 : i32
    %c0_i32_0 = arith.constant 0 : i32
    return %arg0, %c0_i32 : i32, i32
  }
}

</mosaic_0001>

<llo_original>
// kernel: tpu_custom_call.1
$region0: #{tpu_custom_call.1}
  #allocation0 [shape = 'u32[]', space=smem, size = 0x4, offset = 0x4, fixed_abs, tag = 'smem constant byte address 0x4 - core index']
  #allocation1 [shape = 'u32[72,128]{1,0:T(1,128)}', space=vmem, size = 0x9000, scoped, tag = 'internal scratch']
  %s0 = inlined_call_operand.hbm [shape: f32[16,32], index: 0, kind: input, shape index: {}]
  %s1 = inlined_call_operand.hbm [shape: f32[16,128], index: 1, kind: input, shape index: {}]
  %s2 = inlined_call_operand.hbm [shape: f32[128,128], index: 2, kind: input, shape index: {}]
  %s3 = inlined_call_operand.vmem [shape: f32[1,128], index: 3, kind: input, shape index: {}]
  %s4 = inlined_call_operand.hbm [shape: f32[32,128], index: 4, kind: input, shape index: {}]
  %s5 = inlined_call_operand.hbm [shape: f32[128,128], index: 5, kind: input, shape index: {}]
  %s6 = inlined_call_operand.hbm [shape: f32[16,128], index: 6, kind: output, shape index: {}]
  %s7 = sld [smem:[#allocation0]]
  $region77: #{tpu_custom_call.1} parent=0
    _
  %s9 = ssub.s32 1, %s7
  %s10 = scalar_select 0, %s9, %s7
  $region1: #{tpu_custom_call.1} parent=0
    #allocation2 [shape = 'u8[8192]{0}', space=vmem, size = 0x2000, scoped, tag = 'input window, operand 0']
    #allocation3 [shape = 's32[2]{0}', space=sflag, size = 0x8, scoped, tag = 'scoped memory for tpu_custom_call.1']
    #allocation4 [shape = 's32[2]{0}', space=sflag, size = 0x8, scoped, tag = 'scoped memory for tpu_custom_call.1']
    #allocation5 [shape = 'u8[8192]{0}', space=vmem, size = 0x2000, scoped, tag = 'input window, operand 1']
    #allocation6 [shape = 's32[2]{0}', space=sflag, size = 0x8, scoped, tag = 'scoped memory for tpu_custom_call.1']
    #allocation7 [shape = 'u8[65536]{0}', space=vmem, size = 0x10000, scoped, tag = 'input window, operand 2, single buffered']
    #allocation8 [shape = 'u8[16384]{0}', space=vmem, size = 0x4000, scoped, tag = 'input window, operand 4, single buffered']
    #allocation9 [shape = 's32[1]{0}', space=sflag, size = 0x4, scoped, tag = 'scoped memory for tpu_custom_call.1']
    #allocation10 [shape = 'u8[65536]{0}', space=vmem, size = 0x10000, scoped, tag = 'input window, operand 5, single buffered']
    #allocation11 [shape = 'u8[8192]{0}', space=vmem, size = 0x2000, scoped, tag = 'output window, operand 0']
    %11 = vsyncpa [#allocation3], 0
    %s12 = scalar_lea.sflag [#allocation3], 1
    %13 = vsyncpa %s12, 0
    %14 = vsyncpa [#allocation6], 0
    %s15 = scalar_lea.sflag [#allocation6], 1
    %16 = vsyncpa %s15, 0
    %17 = vsyncpa [#allocation9], 0
    %18 = vsyncpa [#allocation4], 0
    %s19 = scalar_lea.sflag [#allocation4], 1
    %20 = vsyncpa %s19, 0
    loop: start=0, step=1, limit=4
    $region2: #{tpu_custom_call.1} parent=1 // loop_pre_header
      _
    $region3: #{tpu_custom_call.1} parent=1 // loop_header
      %s22 = sphi 0, %s26
      %p23 = scmp.ge.s32.totalorder %s22, 4
      %s32 = sphi 0, %s34
      %s35 = sphi 0, %s32
      %s36 = sphi 0, %s35
      %s52 = sphi 0, %s36
      %s58 = sphi 0, %s60
      %s61 = sphi 0, %s58
      %s62 = sphi 0, %s61
      %s78 = sphi 0, %s62
      %s82 = sphi 0, %s82
      %s84 = sphi 0, %s82
      %s85 = sphi 0, %s84
      %s99 = sphi 0, %s85
      %s103 = sphi 0, %s103
      %s105 = sphi 0, %s103
      %s106 = sphi 0, %s105
      %s120 = sphi 0, %s106
      %s124 = sphi 0, %s124
      %s126 = sphi 0, %s124
      %s127 = sphi 0, %s126
      %s141 = sphi 0, %s127
      %s145 = sphi 0, %s145
      %s147 = sphi 0, %s145
      %s148 = sphi 0, %s147
      %s162 = sphi 0, %s148
      %s168 = sphi 0, %s170
      %s171 = sphi 0, %s168
      %s172 = sphi 0, %s171
      %s188 = sphi 0, %s172
    $region4: #{tpu_custom_call.1} parent=1 // loop_header_branch
      %25 = sbr.rel (%p23) target = $region8
    $region5: #{tpu_custom_call.1} parent=1 // loop_body
      %s27 = ssub.s32 %s22, 1
      %s28 = ssub.s32 %s22, 2
      %s29 = sadd.s32 %s22, 1
      %s30 = ssub.s32 %s22, %s29
      %p31 = scmp.eq.s32.totalorder %s30, 0
      %s33 = sadd.s32 %s32, 1
      %s34 = scalar_select %p31, %s32, %s33
      %p37 = pneg %p31
      %p38 = scmp.eq.s32.totalorder %s22, 1
      %p39 = por %p37, %p38
      %p40 = scmp.ne.s32.totalorder %s32, %s35
      %p41 = scmp.eq.s32.totalorder %s22, 0
      %p42 = por %p40, %p41
      %p43 = scmp.ne.s32.totalorder %s32, %s35
      %p44 = scmp.eq.s32.totalorder %s27, 1
      %p45 = por %p43, %p44
      %p46 = scmp.ne.s32.totalorder %s35, %s36
      %p47 = scmp.eq.s32.totalorder %s27, 0
      %p48 = por %p46, %p47
      %p49 = scmp.ne.s32.totalorder %s35, %s36
      %p50 = scmp.eq.s32.totalorder %s28, 1
      %p51 = por %p49, %p50
      %p53 = scmp.ne.s32.totalorder %s36, %s52
      %p54 = scmp.eq.s32.totalorder %s28, 0
      %p55 = por %p53, %p54
      %s56 = ssub.s32 %s22, %s29
      %p57 = scmp.eq.s32.totalorder %s56, 0
      %s59 = sadd.s32 %s58, 1
      %s60 = scalar_select %p57, %s58, %s59
      %p63 = pneg %p57
      %p64 = scmp.eq.s32.totalorder %s22, 1
      %p65 = por %p63, %p64
      %p66 = scmp.ne.s32.totalorder %s58, %s61
      %p67 = scmp.eq.s32.totalorder %s22, 0
      %p68 = por %p66, %p67
      %p69 = scmp.ne.s32.totalorder %s58, %s61
      %p70 = scmp.eq.s32.totalorder %s27, 1
      %p71 = por %p69, %p70
      %p72 = scmp.ne.s32.totalorder %s61, %s62
      %p73 = scmp.eq.s32.totalorder %s27, 0
      %p74 = por %p72, %p73
      %p75 = scmp.ne.s32.totalorder %s61, %s62
      %p76 = scmp.eq.s32.totalorder %s28, 1
      %p77 = por %p75, %p76
      %p79 = scmp.ne.s32.totalorder %s62, %s78
      %p80 = scmp.eq.s32.totalorder %s28, 0
      %p81 = por %p79, %p80
      %s83 = sadd.s32 %s82, 1
      %p86 = scmp.eq.s32.totalorder %s22, 1
      %p87 = scmp.ne.s32.totalorder %s82, %s84
      %p88 = scmp.eq.s32.totalorder %s22, 0
      %p89 = por %p87, %p88
      %p90 = scmp.ne.s32.totalorder %s82, %s84
      %p91 = scmp.eq.s32.totalorder %s27, 1
      %p92 = por %p90, %p91
      %p93 = scmp.ne.s32.totalorder %s84, %s85
      %p94 = scmp.eq.s32.totalorder %s27, 0
      %p95 = por %p93, %p94
      %p96 = scmp.ne.s32.totalorder %s84, %s85
      %p97 = scmp.eq.s32.totalorder %s28, 1
      %p98 = por %p96, %p97
      %p100 = scmp.ne.s32.totalorder %s85, %s99
      %p101 = scmp.eq.s32.totalorder %s28, 0
      %p102 = por %p100, %p101
      %s104 = sadd.s32 %s103, 1
      %p107 = scmp.eq.s32.totalorder %s22, 1
      %p108 = scmp.ne.s32.totalorder %s103, %s105
      %p109 = scmp.eq.s32.totalorder %s22, 0
      %p110 = por %p108, %p109
      %p111 = scmp.ne.s32.totalorder %s103, %s105
      %p112 = scmp.eq.s32.totalorder %s27, 1
      %p113 = por %p111, %p112
      %p114 = scmp.ne.s32.totalorder %s105, %s106
      %p115 = scmp.eq.s32.totalorder %s27, 0
      %p116 = por %p114, %p115
      %p117 = scmp.ne.s32.totalorder %s105, %s106
      %p118 = scmp.eq.s32.totalorder %s28, 1
      %p119 = por %p117, %p118
      %p121 = scmp.ne.s32.totalorder %s106, %s120
      %p122 = scmp.eq.s32.totalorder %s28, 0
      %p123 = por %p121, %p122
      %s125 = sadd.s32 %s124, 1
      %p128 = scmp.eq.s32.totalorder %s22, 1
      %p129 = scmp.ne.s32.totalorder %s124, %s126
      %p130 = scmp.eq.s32.totalorder %s22, 0
      %p131 = por %p129, %p130
      %p132 = scmp.ne.s32.totalorder %s124, %s126
      %p133 = scmp.eq.s32.totalorder %s27, 1
      %p134 = por %p132, %p133
      %p135 = scmp.ne.s32.totalorder %s126, %s127
      %p136 = scmp.eq.s32.totalorder %s27, 0
      %p137 = por %p135, %p136
      %p138 = scmp.ne.s32.totalorder %s126, %s127
      %p139 = scmp.eq.s32.totalorder %s28, 1
      %p140 = por %p138, %p139
      %p142 = scmp.ne.s32.totalorder %s127, %s141
      %p143 = scmp.eq.s32.totalorder %s28, 0
      %p144 = por %p142, %p143
      %s146 = sadd.s32 %s145, 1
      %p149 = scmp.eq.s32.totalorder %s22, 1
      %p150 = scmp.ne.s32.totalorder %s145, %s147
      %p151 = scmp.eq.s32.totalorder %s22, 0
      %p152 = por %p150, %p151
      %p153 = scmp.ne.s32.totalorder %s145, %s147
      %p154 = scmp.eq.s32.totalorder %s27, 1
      %p155 = por %p153, %p154
      %p156 = scmp.ne.s32.totalorder %s147, %s148
      %p157 = scmp.eq.s32.totalorder %s27, 0
      %p158 = por %p156, %p157
      %p159 = scmp.ne.s32.totalorder %s147, %s148
      %p160 = scmp.eq.s32.totalorder %s28, 1
      %p161 = por %p159, %p160
      %p163 = scmp.ne.s32.totalorder %s148, %s162
      %p164 = scmp.eq.s32.totalorder %s28, 0
      %p165 = por %p163, %p164
      %s166 = ssub.s32 %s22, %s29
      %p167 = scmp.eq.s32.totalorder %s166, 0
      %s169 = sadd.s32 %s168, 1
      %s170 = scalar_select %p167, %s168, %s169
      %p173 = pneg %p167
      %p174 = scmp.eq.s32.totalorder %s22, 1
      %p175 = por %p173, %p174
      %p176 = scmp.ne.s32.totalorder %s168, %s171
      %p177 = scmp.eq.s32.totalorder %s22, 0
      %p178 = por %p176, %p177
      %p179 = scmp.ne.s32.totalorder %s168, %s171
      %p180 = scmp.eq.s32.totalorder %s27, 1
      %p181 = por %p179, %p180
      %p182 = scmp.ne.s32.totalorder %s171, %s172
      %p183 = scmp.eq.s32.totalorder %s27, 0
      %p184 = por %p182, %p183
      %p185 = scmp.ne.s32.totalorder %s171, %s172
      %p186 = scmp.eq.s32.totalorder %s28, 1
      %p187 = por %p185, %p186
      %p189 = scmp.ne.s32.totalorder %s172, %s188
      %p190 = scmp.eq.s32.totalorder %s28, 0
      %p191 = por %p189, %p190
      %p192 = scmp.le.s32.totalorder 1, %s22
      %p193 = scmp.lt.s32.totalorder %s22, 3
      %p194 = pnand %p192, %p193
      %p195 = pneg %p194
      // Predicated region
      $region9: #{tpu_custom_call.1} parent=5 // pred_check
        _
      $region10: #{tpu_custom_call.1} parent=5 // pred_check_branch
        %197 = sbr.rel (%p194) target = $region12
      $region11: #{tpu_custom_call.1} parent=5 // pred_region
        %s198 = ssub.s32 %s22, 1
        // Predicated region
        $region13: #{tpu_custom_call.1} parent=11 // pred_check
          %p199 = pneg %p95
        $region14: #{tpu_custom_call.1} parent=11 // pred_check_branch
          %201 = sbr.rel (%p199) target = $region16
        $region15: #{tpu_custom_call.1} parent=11 // pred_region
          %203 = vsyncadd [#allocation6], 0
          %s204 = sshll.u32 %s2, 4
          %s205 = int_to_ptr.hbm [resolvable:$true] %s204
          %s206 = sshll.u32 [#allocation7], 4
          %s207 = int_to_ptr.vmem [resolvable:$true] %s206
          %212 = dma.hbm_to_vmem [thread:$0]  %s205, 2048, %s207, [#allocation6], 128, 128, 8
        $region16: #{tpu_custom_call.1} parent=11 // pred_fallthru
          _
        // Predicated region
        $region17: #{tpu_custom_call.1} parent=11 // pred_check
          %p213 = pneg %p116
        $region18: #{tpu_custom_call.1} parent=11 // pred_check_branch
          %215 = sbr.rel (%p213) target = $region20
        $region19: #{tpu_custom_call.1} parent=11 // pred_region
          _
        $region20: #{tpu_custom_call.1} parent=11 // pred_fallthru
          _
        // Predicated region
        $region21: #{tpu_custom_call.1} parent=11 // pred_check
          %p216 = pneg %p137
        $region22: #{tpu_custom_call.1} parent=11 // pred_check_branch
          %218 = sbr.rel (%p216) target = $region24
        $region23: #{tpu_custom_call.1} parent=11 // pred_region
          %220 = vsyncadd [#allocation9], 0
          %s221 = sshll.u32 %s4, 4
          %s222 = int_to_ptr.hbm [resolvable:$true] %s221
          %s223 = sshll.u32 [#allocation8], 4
          %s224 = int_to_ptr.vmem [resolvable:$true] %s223
          %229 = dma.hbm_to_vmem [thread:$0]  %s222, 512, %s224, [#allocation9], 128, 128, 8
        $region24: #{tpu_custom_call.1} parent=11 // pred_fallthru
          _
        // Predicated region
        $region25: #{tpu_custom_call.1} parent=11 // pred_check
          %p230 = pneg %p158
        $region26: #{tpu_custom_call.1} parent=11 // pred_check_branch
          %232 = sbr.rel (%p230) target = $region28
        $region27: #{tpu_custom_call.1} parent=11 // pred_region
          %234 = vsyncadd [#allocation9], 0
          %s235 = sshll.u32 %s5, 4
          %s236 = int_to_ptr.hbm [resolvable:$true] %s235
          %s237 = sshll.u32 [#allocation10], 4
          %s238 = int_to_ptr.vmem [resolvable:$true] %s237
          %243 = dma.hbm_to_vmem [thread:$0]  %s236, 2048, %s238, [#allocation9], 128, 128, 8
        $region28: #{tpu_custom_call.1} parent=11 // pred_fallthru
          _
      $region12: #{tpu_custom_call.1} parent=5 // pred_fallthru
        _
      %p244 = scmp.lt.s32.totalorder %s22, 2
      // Predicated region
      $region29: #{tpu_custom_call.1} parent=5 // pred_check
        %p245 = pneg %p244
      $region30: #{tpu_custom_call.1} parent=5 // pred_check_branch
        %247 = sbr.rel (%p245) target = $region32
      $region31: #{tpu_custom_call.1} parent=5 // pred_region
        // Predicated region
        $region33: #{tpu_custom_call.1} parent=31 // pred_check
          %p248 = pneg %p42
        $region34: #{tpu_custom_call.1} parent=31 // pred_check_branch
          %250 = sbr.rel (%p248) target = $region36
        $region35: #{tpu_custom_call.1} parent=31 // pred_region
          %s251 = sand.u32 %s32, 1
          %s252 = scalar_lea.sflag [#allocation3], %s251
          %s253 = sand.u32 %s32, 1
          %s254 = smul.addr %s253, 8
          %s255 = scalar_lea.vmem [#allocation2], %s254
          %257 = vsyncadd %s252, 0
          %s258 = smul.addr %s22, 8
          %s259 = scalar_lea.hbm %s0, %s258
          %s261 = sshll.u32 %s259, 4
          %s262 = int_to_ptr.hbm [resolvable:$true] %s261
          %s263 = sshll.u32 %s255, 4
          %s264 = int_to_ptr.vmem [resolvable:$true] %s263
          %266 = dma.hbm_to_vmem [thread:$0]  %s262, 128, %s264, %s252
        $region36: #{tpu_custom_call.1} parent=31 // pred_fallthru
          _
        // Predicated region
        $region37: #{tpu_custom_call.1} parent=31 // pred_check
          %p267 = pneg %p68
        $region38: #{tpu_custom_call.1} parent=31 // pred_check_branch
          %269 = sbr.rel (%p267) target = $region40
        $region39: #{tpu_custom_call.1} parent=31 // pred_region
          %s270 = sand.u32 %s22, 1
          %s271 = scalar_lea.sflag [#allocation6], %s270
          %s272 = sand.u32 %s58, 1
          %s273 = smul.addr %s272, 8
          %s274 = scalar_lea.vmem [#allocation5], %s273
          %276 = vsyncadd %s271, 0
          %s277 = smul.addr %s22, 8
          %s278 = scalar_lea.hbm %s1, %s277
          %s280 = sshll.u32 %s278, 4
          %s281 = int_to_ptr.hbm [resolvable:$true] %s280
          %s282 = sshll.u32 %s274, 4
          %s283 = int_to_ptr.vmem [resolvable:$true] %s282
          %285 = dma.hbm_to_vmem [thread:$0]  %s281, 128, %s283, %s271
        $region40: #{tpu_custom_call.1} parent=31 // pred_fallthru
          _
      $region32: #{tpu_custom_call.1} parent=5 // pred_fallthru
        _
      %p286 = scmp.le.s32.totalorder 1, %s22
      %p287 = scmp.lt.s32.totalorder %s22, 3
      %p288 = pnand %p286, %p287
      %p289 = pneg %p288
      // Predicated region
      $region41: #{tpu_custom_call.1} parent=5 // pred_check
        _
      $region42: #{tpu_custom_call.1} parent=5 // pred_check_branch
        %291 = sbr.rel (%p288) target = $region44
      $region43: #{tpu_custom_call.1} parent=5 // pred_region
        %s292 = ssub.s32 %s22, 1
        %s293 = sand.u32 %s35, 1
        %s294 = scalar_lea.sflag [#allocation3], %s293
        %s295 = sand.u32 %s35, 1
        %s296 = smul.addr %s295, 8
        %s297 = scalar_lea.vmem [#allocation2], %s296
        // Predicated region
        $region45: #{tpu_custom_call.1} parent=43 // pred_check
          %p298 = pneg %p48
        $region46: #{tpu_custom_call.1} parent=43 // pred_check_branch
          %300 = sbr.rel (%p298) target = $region48
        $region47: #{tpu_custom_call.1} parent=43 // pred_region
          %302 = dma.done %s294, 128
        $region48: #{tpu_custom_call.1} parent=43 // pred_fallthru
          _
        %s303 = sand.u32 %s27, 1
        %s304 = scalar_lea.sflag [#allocation6], %s303
        %s305 = sand.u32 %s61, 1
        %s306 = smul.addr %s305, 8
        %s307 = scalar_lea.vmem [#allocation5], %s306
        // Predicated region
        $region49: #{tpu_custom_call.1} parent=43 // pred_check
          %p308 = pneg %p74
        $region50: #{tpu_custom_call.1} parent=43 // pred_check_branch
          %310 = sbr.rel (%p308) target = $region52
        $region51: #{tpu_custom_call.1} parent=43 // pred_region
          %312 = dma.done %s304, 128
        $region52: #{tpu_custom_call.1} parent=43 // pred_fallthru
          _
        // Predicated region
        $region53: #{tpu_custom_call.1} parent=43 // pred_check
          %p313 = pneg %p95
        $region54: #{tpu_custom_call.1} parent=43 // pred_check_branch
          %315 = sbr.rel (%p313) target = $region56
        $region55: #{tpu_custom_call.1} parent=43 // pred_region
          %317 = dma.done [#allocation6], 2048
        $region56: #{tpu_custom_call.1} parent=43 // pred_fallthru
          _
        // Predicated region
        $region57: #{tpu_custom_call.1} parent=43 // pred_check
          %p318 = pneg %p137
        $region58: #{tpu_custom_call.1} parent=43 // pred_check_branch
          %320 = sbr.rel (%p318) target = $region60
        $region59: #{tpu_custom_call.1} parent=43 // pred_region
          %322 = dma.done [#allocation9], 512
        $region60: #{tpu_custom_call.1} parent=43 // pred_fallthru
          _
        // Predicated region
        $region61: #{tpu_custom_call.1} parent=43 // pred_check
          %p323 = pneg %p158
        $region62: #{tpu_custom_call.1} parent=43 // pred_check_branch
          %325 = sbr.rel (%p323) target = $region64
        $region63: #{tpu_custom_call.1} parent=43 // pred_region
          %327 = dma.done [#allocation9], 2048
        $region64: #{tpu_custom_call.1} parent=43 // pred_fallthru
          _
        %s328 = sand.u32 %s35, 1
        %s329 = scalar_lea.sflag [#allocation3], %s328
        %s330 = sand.u32 %s35, 1
        %s331 = smul.addr %s330, 8
        %s332 = scalar_lea.vmem [#allocation2], %s331
        %p333 = pneg %p48
        %p334 = pneg %p45
        %s335 = sand.u32 %s27, 1
        %s336 = scalar_lea.sflag [#allocation6], %s335
        %s337 = sand.u32 %s61, 1
        %s338 = smul.addr %s337, 8
        %s339 = scalar_lea.vmem [#allocation5], %s338
        %p340 = pneg %p74
        %p341 = pneg %p71
        %p342 = pneg %p95
        %p343 = pneg %p92
        %p344 = pneg %p116
        %p345 = pneg %p113
        %p346 = pneg %p137
        %p347 = pneg %p134
        %p348 = pneg %p158
        %p349 = pneg %p155
        %p350 = pneg %p184
        %p351 = pneg %p181
        %s352 = sand.u32 %s171, 1
        %s353 = scalar_lea.sflag [#allocation4], %s352
        %s354 = sand.u32 %s171, 1
        %s355 = smul.addr %s354, 8
        %s356 = scalar_lea.vmem [#allocation11], %s355
        %v357 = vld [vmem:[%s307] sm:$0xff]
        %v358 = vld [vmem:[#allocation7] sm:$0xff]
        %v359 = vld [vmem:[#allocation7 + $0x8] sm:$0xff]
        %v360 = vld [vmem:[#allocation7 + $0x10] sm:$0xff]
        %v361 = vld [vmem:[#allocation7 + $0x18] sm:$0xff]
        %v362 = vld [vmem:[#allocation7 + $0x20] sm:$0xff]
        %v363 = vld [vmem:[#allocation7 + $0x28] sm:$0xff]
        %v364 = vld [vmem:[#allocation7 + $0x30] sm:$0xff]
        %v365 = vld [vmem:[#allocation7 + $0x38] sm:$0xff]
        %v366 = vld [vmem:[#allocation7 + $0x40] sm:$0xff]
        %v367 = vld [vmem:[#allocation7 + $0x48] sm:$0xff]
        %v368 = vld [vmem:[#allocation7 + $0x50] sm:$0xff]
        %v369 = vld [vmem:[#allocation7 + $0x58] sm:$0xff]
        %v370 = vld [vmem:[#allocation7 + $0x60] sm:$0xff]
        %v371 = vld [vmem:[#allocation7 + $0x68] sm:$0xff]
        %v372 = vld [vmem:[#allocation7 + $0x70] sm:$0xff]
        %v373 = vld [vmem:[#allocation7 + $0x78] sm:$0xff]
        %v374 = vld [vmem:[%s3] sm:$0x1]
        %v376 = vperm.slane %v374, 0
        %378 = vmatpush.msra.mxu0 %v373
        %379 = vmatpush.msra.mxu0 %v372
        %380 = vmatpush.msra.mxu0 %v371
        %381 = vmatpush.msra.mxu0 %v370
        %382 = vmatpush.msra.mxu0 %v369
        %383 = vmatpush.msra.mxu0 %v368
        %384 = vmatpush.msra.mxu0 %v367
        %385 = vmatpush.msra.mxu0 %v366
        %386 = vmatpush.msra.mxu0 %v365
        %387 = vmatpush.msra.mxu0 %v364
        %388 = vmatpush.msra.mxu0 %v363
        %389 = vmatpush.msra.mxu0 %v362
        %390 = vmatpush.msra.mxu0 %v361
        %391 = vmatpush.msra.mxu0 %v360
        %392 = vmatpush.msra.mxu0 %v359
        %393 = vmatpush.msra.mxu0 %v358
        %394 = vmatmul.f32.gmra.mxu0 %v357
        %v395 = vpop.f32.mrf.mxu0
        %v396 = vadd.f32 %v376, %v395
        %397 = vdwg.mxu0
        %v398 = vmax.f32 %v396, 0.0
        %v399 = vld [vmem:[#allocation10] sm:$0xff]
        %v400 = vld [vmem:[#allocation10 + $0x8] sm:$0xff]
        %v401 = vld [vmem:[#allocation10 + $0x10] sm:$0xff]
        %v402 = vld [vmem:[#allocation10 + $0x18] sm:$0xff]
        %v403 = vld [vmem:[#allocation10 + $0x20] sm:$0xff]
        %v404 = vld [vmem:[#allocation10 + $0x28] sm:$0xff]
        %v405 = vld [vmem:[#allocation10 + $0x30] sm:$0xff]
        %v406 = vld [vmem:[#allocation10 + $0x38] sm:$0xff]
        %v407 = vld [vmem:[#allocation10 + $0x40] sm:$0xff]
        %v408 = vld [vmem:[#allocation10 + $0x48] sm:$0xff]
        %v409 = vld [vmem:[#allocation10 + $0x50] sm:$0xff]
        %v410 = vld [vmem:[#allocation10 + $0x58] sm:$0xff]
        %v411 = vld [vmem:[#allocation10 + $0x60] sm:$0xff]
        %v412 = vld [vmem:[#allocation10 + $0x68] sm:$0xff]
        %v413 = vld [vmem:[#allocation10 + $0x70] sm:$0xff]
        %v414 = vld [vmem:[#allocation10 + $0x78] sm:$0xff]
        %415 = vmatpush.msra.mxu0 %v414
        %416 = vmatpush.msra.mxu0 %v413
        %417 = vmatpush.msra.mxu0 %v412
        %418 = vmatpush.msra.mxu0 %v411
        %419 = vmatpush.msra.mxu0 %v410
        %420 = vmatpush.msra.mxu0 %v409
        %421 = vmatpush.msra.mxu0 %v408
        %422 = vmatpush.msra.mxu0 %v407
        %423 = vmatpush.msra.mxu0 %v406
        %424 = vmatpush.msra.mxu0 %v405
        %425 = vmatpush.msra.mxu0 %v404
        %426 = vmatpush.msra.mxu0 %v403
        %427 = vmatpush.msra.mxu0 %v402
        %428 = vmatpush.msra.mxu0 %v401
        %429 = vmatpush.msra.mxu0 %v400
        %430 = vmatpush.msra.mxu0 %v399
        %431 = vmatmul.f32.gmra.mxu0 %v398
        %v432 = vpop.f32.mrf.mxu0
        %v433 = vadd.f32 0.0, %v432
        %434 = vdwg.mxu0
        %v435 = vld [vmem:[%s297] sm:$0xff]
        %v436 = vld [vmem:[#allocation8] sm:$0xff]
        %v437 = vld [vmem:[#allocation8 + $0x8] sm:$0xff]
        %v438 = vld [vmem:[#allocation8 + $0x10] sm:$0xff]
        %v439 = vld [vmem:[#allocation8 + $0x18] sm:$0xff]
        %vm440 = vcmask 261120
        %v442 = vsel %vm440, %v435, 0
        %444 = vmatpush.msra.mxu0 0.0
        %445 = vmatpush.msra.mxu0 0.0
        %446 = vmatpush.msra.mxu0 0.0
        %447 = vmatpush.msra.mxu0 0.0
        %448 = vmatpush.msra.mxu0 0.0
        %449 = vmatpush.msra.mxu0 0.0
        %450 = vmatpush.msra.mxu0 0.0
        %451 = vmatpush.msra.mxu0 0.0
        %452 = vmatpush.msra.mxu0 0.0
        %453 = vmatpush.msra.mxu0 0.0
        %454 = vmatpush.msra.mxu0 0.0
        %455 = vmatpush.msra.mxu0 0.0
        %456 = vmatpush.msra.mxu0 %v439
        %457 = vmatpush.msra.mxu0 %v438
        %458 = vmatpush.msra.mxu0 %v437
        %459 = vmatpush.msra.mxu0 %v436
        %460 = vmatmul.f32.gmra.mxu0 %v442
        %v461 = vpop.f32.mrf.mxu0
        %v462 = vadd.f32 %v433, %v461
        %463 = vdwg.mxu0
        %v464 = vmax.f32 %v462, 0.0
        %465 = vst [vmem:[%s356] sm:$0xff] %v464
        %s466 = sand.u32 %s171, 1
        %s467 = scalar_lea.sflag [#allocation4], %s466
        %s468 = sand.u32 %s171, 1
        %s469 = smul.addr %s468, 8
        %s470 = scalar_lea.vmem [#allocation11], %s469
        // Predicated region
        $region65: #{tpu_custom_call.1} parent=43 // pred_check
          %p471 = pneg %p181
        $region66: #{tpu_custom_call.1} parent=43 // pred_check_branch
          %473 = sbr.rel (%p471) target = $region68
        $region67: #{tpu_custom_call.1} parent=43 // pred_region
          %475 = vsyncadd %s467, 0
          %s476 = smul.addr %s27, 8
          %s477 = scalar_lea.hbm %s6, %s476
          %s479 = sshll.u32 %s470, 4
          %s480 = int_to_ptr.vmem [resolvable:$true] %s479
          %s481 = sshll.u32 %s477, 4
          %s482 = int_to_ptr.hbm [resolvable:$true] %s481
          %484 = dma.vmem_to_hbm [thread:$0]  %s480, 128, %s482, %s467
        $region68: #{tpu_custom_call.1} parent=43 // pred_fallthru
          _
      $region44: #{tpu_custom_call.1} parent=5 // pred_fallthru
        _
      %p485 = scmp.le.s32.totalorder 2, %s22
      // Predicated region
      $region69: #{tpu_custom_call.1} parent=5 // pred_check
        %p486 = pneg %p485
      $region70: #{tpu_custom_call.1} parent=5 // pred_check_branch
        %488 = sbr.rel (%p486) target = $region72
      $region71: #{tpu_custom_call.1} parent=5 // pred_region
        %s489 = ssub.s32 %s22, 2
        // Predicated region
        $region73: #{tpu_custom_call.1} parent=71 // pred_check
          %p490 = pneg %p187
        $region74: #{tpu_custom_call.1} parent=71 // pred_check_branch
          %492 = sbr.rel (%p490) target = $region76
        $region75: #{tpu_custom_call.1} parent=71 // pred_region
          %s493 = sand.u32 %s172, 1
          %s494 = scalar_lea.sflag [#allocation4], %s493
          %s495 = sand.u32 %s172, 1
          %s496 = smul.addr %s495, 8
          %s497 = scalar_lea.vmem [#allocation11], %s496
          %499 = dma.done %s494, 128
        $region76: #{tpu_custom_call.1} parent=71 // pred_fallthru
          _
      $region72: #{tpu_custom_call.1} parent=5 // pred_fallthru
        _
    $region6: #{tpu_custom_call.1} parent=1 // loop_footer
      %s26 = sadd.s32 1, %s22
    $region7: #{tpu_custom_call.1} parent=1 // loop_footer_branch
      %21 = sbr.rel target = $region3
    $region8: #{tpu_custom_call.1} parent=1 // loop_exit
      _
    %500 = vsyncpa [#allocation3], 1
    %s501 = scalar_lea.sflag [#allocation3], 1
    %502 = vsyncpa %s501, 1
    %503 = vsyncpa [#allocation6], 1
    %s504 = scalar_lea.sflag [#allocation6], 1
    %505 = vsyncpa %s504, 1
    %506 = vsyncpa [#allocation9], 1
    %507 = vsyncpa [#allocation4], 1
    %s508 = scalar_lea.sflag [#allocation4], 1
    %509 = vsyncpa %s508, 1

</llo_original>
